<compile_context>
chip_gen: v7x
topology: tpu7x:2x2x1
jax: 0.10.0
libtpu: 0.0.40
codegen_flags: <defaults>
</compile_context>

<pallas_src>
import jax
import jax.numpy as jnp
from jax.experimental import pallas as pl
from jax.experimental.pallas import tpu as pltpu


def circle_mlp_kernel(p_ref, x_ref, o_ref):
    # p_ref (SMEM, f32[21]):
    #   p[0:5]   = W1[0, :]   (weights multiplying x feature 0)
    #   p[5:10]  = W1[1, :]   (weights multiplying x feature 1)
    #   p[10:15] = b1
    #   p[15:20] = W2[:, 0]
    #   p[20]    = b2
    # x_ref: (2, tn) f32 VMEM tile (features on sublanes, batch on lanes)
    # o_ref: (1, tn) f32 VMEM tile
    x0 = x_ref[0:1, :]  # (1, tn)
    x1 = x_ref[1:2, :]  # (1, tn)

    y = jnp.zeros_like(x0) + p_ref[20]          # start from b2
    for j in range(5):                          # unrolled: 5 hidden units
        h_j = p_ref[j] * x0 + p_ref[5 + j] * x1 + p_ref[10 + j]
        y = y + p_ref[15 + j] * h_j
    o_ref[...] = y.astype(o_ref.dtype)


def circle_model_v0(x, w1, b1, w2, b2, *, tn=512):
    """x: (N, 2) f32; w1: (2, 5); b1: (5,); w2: (5, 1); b2: (1,) -> (N, 1) f32.

    tn: lane tile width (multiple of 128). For large N use 2048-8192.
    """
    N, in_f = x.shape
    assert in_f == 2
    assert tn % 128 == 0

    # Lane-dense layout: batch on the lane axis, padded to a multiple of tn.
    n_blocks = pl.cdiv(N, tn)
    N_pad = n_blocks * tn
    xT = jnp.zeros((2, N_pad), jnp.float32).at[:, :N].set(x.T.astype(jnp.float32))

    # Flatten all 21 parameters into one small SMEM-resident vector.
    params = jnp.concatenate(
        [w1.reshape(-1), b1.reshape(-1), w2.reshape(-1), b2.reshape(-1)]
    ).astype(jnp.float32)

    out = pl.pallas_call(
        circle_mlp_kernel,
        out_shape=jax.ShapeDtypeStruct((1, N_pad), jnp.float32),
        grid_spec=pltpu.PrefetchScalarGridSpec(
            num_scalar_prefetch=0,
            grid=(n_blocks,),
            in_specs=[
                # 21 scalars, resident in SMEM for the whole grid (no per-step DMA).
                pl.BlockSpec(memory_space=pltpu.MemorySpace.SMEM),
                # x tile: (2, tn) -- sublane dim equals full array dim, lane dim % 128 == 0.
                pl.BlockSpec((2, tn), lambda i: (0, i)),
            ],
            # Lane-dense output tile -> unmasked full-width vector stores.
            out_specs=pl.BlockSpec((1, tn), lambda i: (0, i)),
        ),
        compiler_params=pltpu.CompilerParams(
            dimension_semantics=("parallel",),
        ),
        # Tiny, bandwidth-bound op: ~20 flops and 12 bytes per point.
        cost_estimate=pl.CostEstimate(
            flops=20 * N_pad, transcendentals=0, bytes_accessed=12 * N_pad
        ),
    )(params, xT)

    # Drop padding and return in the PyTorch (N, 1) layout.
    return out[0, :N].reshape(N, 1)


def init_params(key):
    """Deterministic init matching nn.Linear shapes (weights stored transposed)."""
    k1, k2, k3, k4 = jax.random.split(key, 4)
    # nn.Linear(2, 5): weight (5, 2), bias (5,)  -> pass transposed W1 (2, 5)
    bound1 = 1.0 / jnp.sqrt(2.0)
    w1 = jax.random.uniform(k1, (2, 5), jnp.float32, -bound1, bound1)
    b1 = jax.random.uniform(k2, (5,), jnp.float32, -bound1, bound1)
    # nn.Linear(5, 1): weight (1, 5), bias (1,)  -> pass transposed W2 (5, 1)
    bound2 = 1.0 / jnp.sqrt(5.0)
    w2 = jax.random.uniform(k3, (5, 1), jnp.float32, -bound2, bound2)
    b2 = jax.random.uniform(k4, (1,), jnp.float32, -bound2, bound2)
    return w1, b1, w2, b2


if __name__ == "__main__":
    key = jax.random.PRNGKey(0)
    kx, kp = jax.random.split(key)

    # Small batch of 2-D "circle" points; intentionally not a multiple of 128
    # to exercise the padding path.
    N = 1000
    x = jax.random.normal(kx, (N, 2), dtype=jnp.float32)
    w1, b1, w2, b2 = init_params(kp)

    out = circle_model_v0(x, w1, b1, w2, b2, tn=512)
    out = jax.block_until_ready(out)

    # Pure-JAX reference check (same math as the PyTorch forward).
    ref = (x @ w1 + b1[None, :]) @ w2 + b2[None, :]
    assert out.shape == (N, 1)
    assert jnp.allclose(out, ref, atol=1e-5, rtol=1e-5)

    print("KERNEL_OK")
</pallas_src>

<mosaic_0001>
module attributes {stable_mosaic.version = 11 : i64} {
  func.func @circle_mlp_kernel(%arg0: i32, %arg1: memref<21xf32, #tpu.memory_space<smem>>, %arg2: memref<2x512xf32, #tpu.memory_space<vmem>>, %arg3: memref<1x512xf32, #tpu.memory_space<vmem>>) attributes {dimension_semantics = [#tpu.dimension_semantics<parallel>], iteration_bounds = array<i64: 2>, scalar_prefetch = 0 : i64, scratch_operands = 0 : i64, tpu.core_type = #tpu.core_type<tc>, window_params = [{transform_indices = @transform_0, window_bounds = array<i64: 21>}, {transform_indices = @transform_1, window_bounds = array<i64: 2, 512>}, {transform_indices = @transform_2, window_bounds = array<i64: 1, 512>}]} {
    %c0 = arith.constant 0 : index
    %c0_0 = arith.constant 0 : index
    %0 = vector.load %arg2[%c0, %c0_0] : memref<2x512xf32, #tpu.memory_space<vmem>>, vector<1x512xf32>
    %c1 = arith.constant 1 : index
    %c0_1 = arith.constant 0 : index
    %1 = vector.load %arg2[%c1, %c0_1] : memref<2x512xf32, #tpu.memory_space<vmem>>, vector<1x512xf32>
    %cst = arith.constant 0.000000e+00 : f32
    %2 = vector.broadcast %cst : f32 to vector<1x512xf32>
    %c20 = arith.constant 20 : index
    %3 = memref.load %arg1[%c20] : memref<21xf32, #tpu.memory_space<smem>>
    %4 = vector.broadcast %3 : f32 to vector<1x512xf32>
    %5 = arith.addf %2, %4 : vector<1x512xf32>
    %c0_2 = arith.constant 0 : index
    %6 = memref.load %arg1[%c0_2] : memref<21xf32, #tpu.memory_space<smem>>
    %7 = vector.broadcast %6 : f32 to vector<1x512xf32>
    %8 = arith.mulf %7, %0 : vector<1x512xf32>
    %c5 = arith.constant 5 : index
    %9 = memref.load %arg1[%c5] : memref<21xf32, #tpu.memory_space<smem>>
    %10 = vector.broadcast %9 : f32 to vector<1x512xf32>
    %11 = arith.mulf %10, %1 : vector<1x512xf32>
    %12 = arith.addf %8, %11 : vector<1x512xf32>
    %c10 = arith.constant 10 : index
    %13 = memref.load %arg1[%c10] : memref<21xf32, #tpu.memory_space<smem>>
    %14 = vector.broadcast %13 : f32 to vector<1x512xf32>
    %15 = arith.addf %12, %14 : vector<1x512xf32>
    %c15 = arith.constant 15 : index
    %16 = memref.load %arg1[%c15] : memref<21xf32, #tpu.memory_space<smem>>
    %17 = vector.broadcast %16 : f32 to vector<1x512xf32>
    %18 = arith.mulf %17, %15 : vector<1x512xf32>
    %19 = arith.addf %5, %18 : vector<1x512xf32>
    %c1_3 = arith.constant 1 : index
    %20 = memref.load %arg1[%c1_3] : memref<21xf32, #tpu.memory_space<smem>>
    %21 = vector.broadcast %20 : f32 to vector<1x512xf32>
    %22 = arith.mulf %21, %0 : vector<1x512xf32>
    %c6 = arith.constant 6 : index
    %23 = memref.load %arg1[%c6] : memref<21xf32, #tpu.memory_space<smem>>
    %24 = vector.broadcast %23 : f32 to vector<1x512xf32>
    %25 = arith.mulf %24, %1 : vector<1x512xf32>
    %26 = arith.addf %22, %25 : vector<1x512xf32>
    %c11 = arith.constant 11 : index
    %27 = memref.load %arg1[%c11] : memref<21xf32, #tpu.memory_space<smem>>
    %28 = vector.broadcast %27 : f32 to vector<1x512xf32>
    %29 = arith.addf %26, %28 : vector<1x512xf32>
    %c16 = arith.constant 16 : index
    %30 = memref.load %arg1[%c16] : memref<21xf32, #tpu.memory_space<smem>>
    %31 = vector.broadcast %30 : f32 to vector<1x512xf32>
    %32 = arith.mulf %31, %29 : vector<1x512xf32>
    %33 = arith.addf %19, %32 : vector<1x512xf32>
    %c2 = arith.constant 2 : index
    %34 = memref.load %arg1[%c2] : memref<21xf32, #tpu.memory_space<smem>>
    %35 = vector.broadcast %34 : f32 to vector<1x512xf32>
    %36 = arith.mulf %35, %0 : vector<1x512xf32>
    %c7 = arith.constant 7 : index
    %37 = memref.load %arg1[%c7] : memref<21xf32, #tpu.memory_space<smem>>
    %38 = vector.broadcast %37 : f32 to vector<1x512xf32>
    %39 = arith.mulf %38, %1 : vector<1x512xf32>
    %40 = arith.addf %36, %39 : vector<1x512xf32>
    %c12 = arith.constant 12 : index
    %41 = memref.load %arg1[%c12] : memref<21xf32, #tpu.memory_space<smem>>
    %42 = vector.broadcast %41 : f32 to vector<1x512xf32>
    %43 = arith.addf %40, %42 : vector<1x512xf32>
    %c17 = arith.constant 17 : index
    %44 = memref.load %arg1[%c17] : memref<21xf32, #tpu.memory_space<smem>>
    %45 = vector.broadcast %44 : f32 to vector<1x512xf32>
    %46 = arith.mulf %45, %43 : vector<1x512xf32>
    %47 = arith.addf %33, %46 : vector<1x512xf32>
    %c3 = arith.constant 3 : index
    %48 = memref.load %arg1[%c3] : memref<21xf32, #tpu.memory_space<smem>>
    %49 = vector.broadcast %48 : f32 to vector<1x512xf32>
    %50 = arith.mulf %49, %0 : vector<1x512xf32>
    %c8 = arith.constant 8 : index
    %51 = memref.load %arg1[%c8] : memref<21xf32, #tpu.memory_space<smem>>
    %52 = vector.broadcast %51 : f32 to vector<1x512xf32>
    %53 = arith.mulf %52, %1 : vector<1x512xf32>
    %54 = arith.addf %50, %53 : vector<1x512xf32>
    %c13 = arith.constant 13 : index
    %55 = memref.load %arg1[%c13] : memref<21xf32, #tpu.memory_space<smem>>
    %56 = vector.broadcast %55 : f32 to vector<1x512xf32>
    %57 = arith.addf %54, %56 : vector<1x512xf32>
    %c18 = arith.constant 18 : index
    %58 = memref.load %arg1[%c18] : memref<21xf32, #tpu.memory_space<smem>>
    %59 = vector.broadcast %58 : f32 to vector<1x512xf32>
    %60 = arith.mulf %59, %57 : vector<1x512xf32>
    %61 = arith.addf %47, %60 : vector<1x512xf32>
    %c4 = arith.constant 4 : index
    %62 = memref.load %arg1[%c4] : memref<21xf32, #tpu.memory_space<smem>>
    %63 = vector.broadcast %62 : f32 to vector<1x512xf32>
    %64 = arith.mulf %63, %0 : vector<1x512xf32>
    %c9 = arith.constant 9 : index
    %65 = memref.load %arg1[%c9] : memref<21xf32, #tpu.memory_space<smem>>
    %66 = vector.broadcast %65 : f32 to vector<1x512xf32>
    %67 = arith.mulf %66, %1 : vector<1x512xf32>
    %68 = arith.addf %64, %67 : vector<1x512xf32>
    %c14 = arith.constant 14 : index
    %69 = memref.load %arg1[%c14] : memref<21xf32, #tpu.memory_space<smem>>
    %70 = vector.broadcast %69 : f32 to vector<1x512xf32>
    %71 = arith.addf %68, %70 : vector<1x512xf32>
    %c19 = arith.constant 19 : index
    %72 = memref.load %arg1[%c19] : memref<21xf32, #tpu.memory_space<smem>>
    %73 = vector.broadcast %72 : f32 to vector<1x512xf32>
    %74 = arith.mulf %73, %71 : vector<1x512xf32>
    %75 = arith.addf %61, %74 : vector<1x512xf32>
    %c0_4 = arith.constant 0 : index
    %c0_5 = arith.constant 0 : index
    %76 = vector.load %arg3[%c0_4, %c0_5] : memref<1x512xf32, #tpu.memory_space<vmem>>, vector<1x512xf32>
    tpu.vector_store %arg3[%c0_4, %c0_5], %75 {strides = array<i32>} : memref<1x512xf32, #tpu.memory_space<vmem>>, vector<1x512xf32>,
    return
  }
  func.func @transform_0(%arg0: i32) -> i32 {
    %c0_i32 = arith.constant 0 : i32
    %c0_i32_0 = arith.constant 0 : i32
    return %c0_i32 : i32
  }
  func.func @transform_1(%arg0: i32) -> (i32, i32) {
    %c0_i32 = arith.constant 0 : i32
    %c0_i32_0 = arith.constant 0 : i32
    return %c0_i32, %arg0 : i32, i32
  }
  func.func @transform_2(%arg0: i32) -> (i32, i32) {
    %c0_i32 = arith.constant 0 : i32
    %c0_i32_0 = arith.constant 0 : i32
    return %c0_i32, %arg0 : i32, i32
  }
}

</mosaic_0001>

<llo_original>
// kernel: tpu_custom_call.1
$region0: #{tpu_custom_call.1}
  #allocation0 [shape = 'u32[]', space=smem, size = 0x4, offset = 0x4, fixed_abs, tag = 'smem constant byte address 0x4 - core index']
  #allocation1 [shape = 'u32[144,128]{1,0:T(1,128)}', space=vmem, size = 0x12000, scoped, tag = 'internal scratch']
  %s0 = inlined_call_operand.hbm [shape: f32[21], index: 0, kind: input, shape index: {}]
  %s1 = inlined_call_operand.hbm [shape: f32[2,1024], index: 1, kind: input, shape index: {}]
  %s2 = inlined_call_operand.hbm [shape: f32[1,1024], index: 2, kind: output, shape index: {}]
  %s3 = sld [smem:[#allocation0]]
  $region49: #{tpu_custom_call.1} parent=0
    _
  %s5 = ssub.s32 1, %s3
  %s6 = scalar_select 0, %s5, %s3
  $region1: #{tpu_custom_call.1} parent=0
    #allocation2 [shape = 'u8[512]{0}', space=smem, size = 0x200, scoped, tag = 'input window, operand 0, single buffered']
    #allocation3 [shape = 's32[2]{0}', space=sflag, size = 0x8, scoped, tag = 'scoped memory for tpu_custom_call.1']
    #allocation4 [shape = 's32[2]{0}', space=sflag, size = 0x8, scoped, tag = 'scoped memory for tpu_custom_call.1']
    #allocation5 [shape = 's32[2]{0}', space=sflag, size = 0x8, scoped, tag = 'scoped memory for tpu_custom_call.1']
    #allocation6 [shape = 'u8[8192]{0}', space=vmem, size = 0x2000, scoped, tag = 'input window, operand 1']
    #allocation7 [shape = 'u8[4096]{0}', space=vmem, size = 0x1000, scoped, tag = 'output window, operand 0']
    %7 = vsyncpa [#allocation5], 0
    %8 = vsyncpa [#allocation3], 0
    %s9 = scalar_lea.sflag [#allocation3], 1
    %10 = vsyncpa %s9, 0
    %11 = vsyncpa [#allocation4], 0
    %s12 = scalar_lea.sflag [#allocation4], 1
    %13 = vsyncpa %s12, 0
    loop: start=0, step=1, limit=4
    $region2: #{tpu_custom_call.1} parent=1 // loop_pre_header
      _
    $region3: #{tpu_custom_call.1} parent=1 // loop_header
      %s15 = sphi 0, %s19
      %p16 = scmp.ge.s32.totalorder %s15, 4
      %s23 = sphi 0, %s23
      %s25 = sphi 0, %s23
      %s26 = sphi 0, %s25
      %s40 = sphi 0, %s26
      %s46 = sphi 0, %s48
      %s49 = sphi 0, %s46
      %s50 = sphi 0, %s49
      %s66 = sphi 0, %s50
      %s72 = sphi 0, %s74
      %s75 = sphi 0, %s72
      %s76 = sphi 0, %s75
      %s92 = sphi 0, %s76
    $region4: #{tpu_custom_call.1} parent=1 // loop_header_branch
      %18 = sbr.rel (%p16) target = $region8
    $region5: #{tpu_custom_call.1} parent=1 // loop_body
      %s20 = ssub.s32 %s15, 1
      %s21 = ssub.s32 %s15, 2
      %s22 = sadd.s32 %s15, 1
      %s24 = sadd.s32 %s23, 1
      %p27 = scmp.eq.s32.totalorder %s15, 1
      %p28 = scmp.ne.s32.totalorder %s23, %s25
      %p29 = scmp.eq.s32.totalorder %s15, 0
      %p30 = por %p28, %p29
      %p31 = scmp.ne.s32.totalorder %s23, %s25
      %p32 = scmp.eq.s32.totalorder %s20, 1
      %p33 = por %p31, %p32
      %p34 = scmp.ne.s32.totalorder %s25, %s26
      %p35 = scmp.eq.s32.totalorder %s20, 0
      %p36 = por %p34, %p35
      %p37 = scmp.ne.s32.totalorder %s25, %s26
      %p38 = scmp.eq.s32.totalorder %s21, 1
      %p39 = por %p37, %p38
      %p41 = scmp.ne.s32.totalorder %s26, %s40
      %p42 = scmp.eq.s32.totalorder %s21, 0
      %p43 = por %p41, %p42
      %s44 = ssub.s32 %s15, %s22
      %p45 = scmp.eq.s32.totalorder %s44, 0
      %s47 = sadd.s32 %s46, 1
      %s48 = scalar_select %p45, %s46, %s47
      %p51 = pneg %p45
      %p52 = scmp.eq.s32.totalorder %s15, 1
      %p53 = por %p51, %p52
      %p54 = scmp.ne.s32.totalorder %s46, %s49
      %p55 = scmp.eq.s32.totalorder %s15, 0
      %p56 = por %p54, %p55
      %p57 = scmp.ne.s32.totalorder %s46, %s49
      %p58 = scmp.eq.s32.totalorder %s20, 1
      %p59 = por %p57, %p58
      %p60 = scmp.ne.s32.totalorder %s49, %s50
      %p61 = scmp.eq.s32.totalorder %s20, 0
      %p62 = por %p60, %p61
      %p63 = scmp.ne.s32.totalorder %s49, %s50
      %p64 = scmp.eq.s32.totalorder %s21, 1
      %p65 = por %p63, %p64
      %p67 = scmp.ne.s32.totalorder %s50, %s66
      %p68 = scmp.eq.s32.totalorder %s21, 0
      %p69 = por %p67, %p68
      %s70 = ssub.s32 %s15, %s22
      %p71 = scmp.eq.s32.totalorder %s70, 0
      %s73 = sadd.s32 %s72, 1
      %s74 = scalar_select %p71, %s72, %s73
      %p77 = pneg %p71
      %p78 = scmp.eq.s32.totalorder %s15, 1
      %p79 = por %p77, %p78
      %p80 = scmp.ne.s32.totalorder %s72, %s75
      %p81 = scmp.eq.s32.totalorder %s15, 0
      %p82 = por %p80, %p81
      %p83 = scmp.ne.s32.totalorder %s72, %s75
      %p84 = scmp.eq.s32.totalorder %s20, 1
      %p85 = por %p83, %p84
      %p86 = scmp.ne.s32.totalorder %s75, %s76
      %p87 = scmp.eq.s32.totalorder %s20, 0
      %p88 = por %p86, %p87
      %p89 = scmp.ne.s32.totalorder %s75, %s76
      %p90 = scmp.eq.s32.totalorder %s21, 1
      %p91 = por %p89, %p90
      %p93 = scmp.ne.s32.totalorder %s76, %s92
      %p94 = scmp.eq.s32.totalorder %s21, 0
      %p95 = por %p93, %p94
      %p96 = scmp.le.s32.totalorder 1, %s15
      %p97 = scmp.lt.s32.totalorder %s15, 3
      %p98 = pnand %p96, %p97
      %p99 = pneg %p98
      // Predicated region
      $region9: #{tpu_custom_call.1} parent=5 // pred_check
        _
      $region10: #{tpu_custom_call.1} parent=5 // pred_check_branch
        %101 = sbr.rel (%p98) target = $region12
      $region11: #{tpu_custom_call.1} parent=5 // pred_region
        %s102 = ssub.s32 %s15, 1
        // Predicated region
        $region13: #{tpu_custom_call.1} parent=11 // pred_check
          %p103 = pneg %p36
        $region14: #{tpu_custom_call.1} parent=11 // pred_check_branch
          %105 = sbr.rel (%p103) target = $region16
        $region15: #{tpu_custom_call.1} parent=11 // pred_region
          %s107 = ssub.s32 16, 16
          %108 = vsyncadd [#allocation5], %s107
          %111 = dma.hbm_to_smem %s0, 16, [#allocation2], [#allocation5]
        $region16: #{tpu_custom_call.1} parent=11 // pred_fallthru
          _
      $region12: #{tpu_custom_call.1} parent=5 // pred_fallthru
        _
      %p112 = scmp.lt.s32.totalorder %s15, 2
      // Predicated region
      $region17: #{tpu_custom_call.1} parent=5 // pred_check
        %p113 = pneg %p112
      $region18: #{tpu_custom_call.1} parent=5 // pred_check_branch
        %115 = sbr.rel (%p113) target = $region20
      $region19: #{tpu_custom_call.1} parent=5 // pred_region
        // Predicated region
        $region21: #{tpu_custom_call.1} parent=19 // pred_check
          %p116 = pneg %p56
        $region22: #{tpu_custom_call.1} parent=19 // pred_check_branch
          %118 = sbr.rel (%p116) target = $region24
        $region23: #{tpu_custom_call.1} parent=19 // pred_region
          %s119 = sand.u32 %s46, 1
          %s120 = scalar_lea.sflag [#allocation3], %s119
          %s121 = sand.u32 %s46, 1
          %s122 = smul.addr %s121, 8
          %s123 = scalar_lea.vmem [#allocation6], %s122
          %s124 = smul.u32 4, %s15
          %s126 = ssub.s32 128, 128
          %127 = vsyncadd %s120, %s126
          %s128 = smul.addr %s124, 32
          %s129 = scalar_lea.hbm %s1, %s128
          %s131 = sshll.u32 %s123, 4
          %s132 = int_to_ptr.vmem [resolvable:$true] %s131
          %134 = dma.hbm_to_vmem [thread:$0]  %s129, 128, %s132, %s120
        $region24: #{tpu_custom_call.1} parent=19 // pred_fallthru
          _
      $region20: #{tpu_custom_call.1} parent=5 // pred_fallthru
        _
      %p135 = scmp.le.s32.totalorder 1, %s15
      %p136 = scmp.lt.s32.totalorder %s15, 3
      %p137 = pnand %p135, %p136
      %p138 = pneg %p137
      // Predicated region
      $region25: #{tpu_custom_call.1} parent=5 // pred_check
        _
      $region26: #{tpu_custom_call.1} parent=5 // pred_check_branch
        %140 = sbr.rel (%p137) target = $region28
      $region27: #{tpu_custom_call.1} parent=5 // pred_region
        %s141 = ssub.s32 %s15, 1
        // Predicated region
        $region29: #{tpu_custom_call.1} parent=27 // pred_check
          %p142 = pneg %p36
        $region30: #{tpu_custom_call.1} parent=27 // pred_check_branch
          %144 = sbr.rel (%p142) target = $region32
        $region31: #{tpu_custom_call.1} parent=27 // pred_region
          %145 = dma.done [#allocation5], 16
        $region32: #{tpu_custom_call.1} parent=27 // pred_fallthru
          _
        %s146 = sand.u32 %s49, 1
        %s147 = scalar_lea.sflag [#allocation3], %s146
        %s148 = sand.u32 %s49, 1
        %s149 = smul.addr %s148, 8
        %s150 = scalar_lea.vmem [#allocation6], %s149
        // Predicated region
        $region33: #{tpu_custom_call.1} parent=27 // pred_check
          %p151 = pneg %p62
        $region34: #{tpu_custom_call.1} parent=27 // pred_check_branch
          %153 = sbr.rel (%p151) target = $region36
        $region35: #{tpu_custom_call.1} parent=27 // pred_region
          %154 = dma.done %s147, 128
        $region36: #{tpu_custom_call.1} parent=27 // pred_fallthru
          _
        %155 = sfence
        %p156 = pneg %p36
        %p157 = pneg %p33
        %s158 = sand.u32 %s49, 1
        %s159 = scalar_lea.sflag [#allocation3], %s158
        %s160 = sand.u32 %s49, 1
        %s161 = smul.addr %s160, 8
        %s162 = scalar_lea.vmem [#allocation6], %s161
        %p163 = pneg %p62
        %p164 = pneg %p59
        %p165 = pneg %p88
        %p166 = pneg %p85
        %s167 = sand.u32 %s75, 1
        %s168 = scalar_lea.sflag [#allocation4], %s167
        %s169 = sand.u32 %s75, 1
        %s170 = smul.addr %s169, 4
        %s171 = scalar_lea.vmem [#allocation7], %s170
        %s172 = smul.u32 4, %s20
        %s173 = smul.u32 4, %s20
        %v174 = vld [vmem:[%s150] ss:$2 sm:$0xf]
        %s175 = scalar_lea.vmem %s150, 1 [#allocation6]
        %v176 = vld [vmem:[%s175] ss:$2 sm:$0xf]
        %s177 = sld [smem:[#allocation2 + $0x14]]
        %v178 = vstv %s177
        %v179 = vadd.f32 %v178, 0.0
        %s180 = sld [smem:[#allocation2]]
        %v181 = vstv %s180
        %v182 = vmul.f32 %v181, %v174
        %s183 = sld [smem:[#allocation2 + $0x5]]
        %v184 = vstv %s183
        %v185 = vmul.f32 %v184, %v176
        %v186 = vadd.f32 %v182, %v185
        %s187 = sld [smem:[#allocation2 + $0xa]]
        %v188 = vstv %s187
        %v189 = vadd.f32 %v186, %v188
        %s190 = sld [smem:[#allocation2 + $0xf]]
        %v191 = vstv %s190
        %v192 = vmul.f32 %v191, %v189
        %v193 = vadd.f32 %v179, %v192
        %s194 = sld [smem:[#allocation2 + $0x1]]
        %v195 = vstv %s194
        %v196 = vmul.f32 %v195, %v174
        %s197 = sld [smem:[#allocation2 + $0x6]]
        %v198 = vstv %s197
        %v199 = vmul.f32 %v198, %v176
        %v200 = vadd.f32 %v196, %v199
        %s201 = sld [smem:[#allocation2 + $0xb]]
        %v202 = vstv %s201
        %v203 = vadd.f32 %v200, %v202
        %s204 = sld [smem:[#allocation2 + $0x10]]
        %v205 = vstv %s204
        %v206 = vmul.f32 %v205, %v203
        %v207 = vadd.f32 %v193, %v206
        %s208 = sld [smem:[#allocation2 + $0x2]]
        %v209 = vstv %s208
        %v210 = vmul.f32 %v209, %v174
        %s211 = sld [smem:[#allocation2 + $0x7]]
        %v212 = vstv %s211
        %v213 = vmul.f32 %v212, %v176
        %v214 = vadd.f32 %v210, %v213
        %s215 = sld [smem:[#allocation2 + $0xc]]
        %v216 = vstv %s215
        %v217 = vadd.f32 %v214, %v216
        %s218 = sld [smem:[#allocation2 + $0x11]]
        %v219 = vstv %s218
        %v220 = vmul.f32 %v219, %v217
        %v221 = vadd.f32 %v207, %v220
        %s222 = sld [smem:[#allocation2 + $0x3]]
        %v223 = vstv %s222
        %v224 = vmul.f32 %v223, %v174
        %s225 = sld [smem:[#allocation2 + $0x8]]
        %v226 = vstv %s225
        %v227 = vmul.f32 %v226, %v176
        %v228 = vadd.f32 %v224, %v227
        %s229 = sld [smem:[#allocation2 + $0xd]]
        %v230 = vstv %s229
        %v231 = vadd.f32 %v228, %v230
        %s232 = sld [smem:[#allocation2 + $0x12]]
        %v233 = vstv %s232
        %v234 = vmul.f32 %v233, %v231
        %v235 = vadd.f32 %v221, %v234
        %s236 = sld [smem:[#allocation2 + $0x4]]
        %v237 = vstv %s236
        %v238 = vmul.f32 %v237, %v174
        %s239 = sld [smem:[#allocation2 + $0x9]]
        %v240 = vstv %s239
        %v241 = vmul.f32 %v240, %v176
        %v242 = vadd.f32 %v238, %v241
        %s243 = sld [smem:[#allocation2 + $0xe]]
        %v244 = vstv %s243
        %v245 = vadd.f32 %v242, %v244
        %s246 = sld [smem:[#allocation2 + $0x13]]
        %v247 = vstv %s246
        %v248 = vmul.f32 %v247, %v245
        %v249 = vadd.f32 %v235, %v248
        %v250 = vlaneseq
        %vm251 = vcmp.ge.s32.totalorder %v250, 0
        %vm252 = vcmp.lt.s32.totalorder %v250, 512
        %vm253 = vmand %vm251, %vm252
        %254 = vst.msk [vmem:[%s171] sm:$0xf] %vm253, %v249
        %s255 = sand.u32 %s75, 1
        %s256 = scalar_lea.sflag [#allocation4], %s255
        %s257 = sand.u32 %s75, 1
        %s258 = smul.addr %s257, 4
        %s259 = scalar_lea.vmem [#allocation7], %s258
        // Predicated region
        $region37: #{tpu_custom_call.1} parent=27 // pred_check
          %p260 = pneg %p85
        $region38: #{tpu_custom_call.1} parent=27 // pred_check_branch
          %262 = sbr.rel (%p260) target = $region40
        $region39: #{tpu_custom_call.1} parent=27 // pred_region
          %s263 = smul.u32 4, %s20
          %s265 = ssub.s32 64, 64
          %266 = vsyncadd %s256, %s265
          %s267 = smul.addr %s263, 16
          %s268 = scalar_lea.hbm %s2, %s267
          %s270 = sshll.u32 %s259, 4
          %s271 = int_to_ptr.vmem [resolvable:$true] %s270
          %273 = dma.vmem_to_hbm [thread:$0]  %s271, 64, %s268, %s256
        $region40: #{tpu_custom_call.1} parent=27 // pred_fallthru
          _
      $region28: #{tpu_custom_call.1} parent=5 // pred_fallthru
        _
      %p274 = scmp.le.s32.totalorder 2, %s15
      // Predicated region
      $region41: #{tpu_custom_call.1} parent=5 // pred_check
        %p275 = pneg %p274
      $region42: #{tpu_custom_call.1} parent=5 // pred_check_branch
        %277 = sbr.rel (%p275) target = $region44
      $region43: #{tpu_custom_call.1} parent=5 // pred_region
        %s278 = ssub.s32 %s15, 2
        // Predicated region
        $region45: #{tpu_custom_call.1} parent=43 // pred_check
          %p279 = pneg %p91
        $region46: #{tpu_custom_call.1} parent=43 // pred_check_branch
          %281 = sbr.rel (%p279) target = $region48
        $region47: #{tpu_custom_call.1} parent=43 // pred_region
          %s282 = sand.u32 %s76, 1
          %s283 = scalar_lea.sflag [#allocation4], %s282
          %s284 = sand.u32 %s76, 1
          %s285 = smul.addr %s284, 4
          %s286 = scalar_lea.vmem [#allocation7], %s285
          %287 = dma.done %s283, 64
        $region48: #{tpu_custom_call.1} parent=43 // pred_fallthru
          _
      $region44: #{tpu_custom_call.1} parent=5 // pred_fallthru
        _
    $region6: #{tpu_custom_call.1} parent=1 // loop_footer
      %s19 = sadd.s32 1, %s15
    $region7: #{tpu_custom_call.1} parent=1 // loop_footer_branch
      %14 = sbr.rel target = $region3
    $region8: #{tpu_custom_call.1} parent=1 // loop_exit
      _
    %288 = vsyncpa [#allocation3], 1
    %s289 = scalar_lea.sflag [#allocation3], 1
    %290 = vsyncpa %s289, 1
    %291 = vsyncpa [#allocation4], 1
    %s292 = scalar_lea.sflag [#allocation4], 1
    %293 = vsyncpa %s292, 1
    %294 = vsyncpa [#allocation5], 1
    %s295 = scalar_lea.sflag [#allocation5], 1
    %296 = vsyncpa %s295, 1

</llo_original>
